<compile_context>
chip_gen: v6e
topology: v6e:2x2x1
jax: 0.10.0
libtpu: 0.0.40
codegen_flags: <defaults>
</compile_context>

<pallas_src>
import functools

import jax
import jax.numpy as jnp
from jax.experimental import pallas as pl
from jax.experimental.pallas import tpu as pltpu

D_IN = 2      # fc1 in_features
D_OUT = 3     # fc2 out_features == model output width
D_PAD = 128   # lane-padded hidden width (MXU/VMEM friendly)
W1_ROWS = 8   # sublane-padded row count for the (2, D_PAD) fc1 weight


def mlp_kernel(x_ref, w1_ref, b1_ref, w2_ref, b2_ref, o_ref):
    x = x_ref[...]                       # (TILE_B, 2) f32
    w1 = w1_ref[...]                     # (8, 128) f32, rows >= 2 are zero

    # fc1 + relu, as two rank-1 VPU updates (K = 2 -> no tiny-K matmul and no
    # HBM-side lane padding of x).
    h = x[:, 0:1] * w1[0:1, :] + x[:, 1:2] * w1[1:2, :] + b1_ref[...]
    h = jnp.maximum(h, 0.0)              # (TILE_B, 128); lanes >= 3 are zero

    w2 = w2_ref[...]                     # (128, 128), zero-padded
    b2 = b2_ref[...]                     # (1, 128)

    # fc2 + relu
    h = jnp.dot(h, w2, preferred_element_type=jnp.float32) + b2
    h = jnp.maximum(h, 0.0)
    # fc2 again (no relu) — faithful to the PyTorch forward.
    h = jnp.dot(h, w2, preferred_element_type=jnp.float32) + b2

    # Narrow (masked) writeback of the 3 real output lanes.
    o_ref[...] = h[:, :D_OUT].astype(o_ref.dtype)


def prepare_params(params):
    """One-time parameter prep: pad to MXU/VMEM-friendly shapes.

    Zero padding is exact: padded weight rows/cols and biases are 0 and
    relu(0) = 0, so the real (B, 3) result is unchanged.
    Call this ONCE; per-call work should only touch x.
    """
    w1, b1, w2, b2 = params  # w1: (2,3), b1: (3,), w2: (3,3), b2: (3,)
    f32 = jnp.float32
    w1p = jnp.zeros((W1_ROWS, D_PAD), f32).at[:D_IN, :D_OUT].set(w1.astype(f32))
    b1p = jnp.zeros((1, D_PAD), f32).at[0, :D_OUT].set(b1.astype(f32))
    w2p = jnp.zeros((D_PAD, D_PAD), f32).at[:D_OUT, :D_OUT].set(w2.astype(f32))
    b2p = jnp.zeros((1, D_PAD), f32).at[0, :D_OUT].set(b2.astype(f32))
    return (w1p, b1p, w2p, b2p)


def _net_forward_impl(x, padded_params):
    """x: (B, 2) float32. Returns (B, 3) float32."""
    w1p, b1p, w2p, b2p = padded_params
    B = x.shape[0]
    tile_b = min(512, max(8, ((B + 7) // 8) * 8))
    grid = (pl.cdiv(B, tile_b),)

    return pl.pallas_call(
        mlp_kernel,
        out_shape=jax.ShapeDtypeStruct((B, D_OUT), jnp.float32),
        grid=grid,
        in_specs=[
            pl.BlockSpec((tile_b, D_IN), lambda i: (i, 0)),     # x: streamed per tile
            pl.BlockSpec((W1_ROWS, D_PAD), lambda i: (0, 0)),   # weights/biases stay
            pl.BlockSpec((1, D_PAD), lambda i: (0, 0)),         # VMEM-resident across
            pl.BlockSpec((D_PAD, D_PAD), lambda i: (0, 0)),     # grid steps (constant
            pl.BlockSpec((1, D_PAD), lambda i: (0, 0)),         # block index -> no re-DMA)
        ],
        out_specs=pl.BlockSpec((tile_b, D_OUT), lambda i: (i, 0)),
        compiler_params=pltpu.CompilerParams(
            dimension_semantics=("parallel",),   # shard batch steps across TCs (v7x)
        ),
    )(x.astype(jnp.float32), w1p, b1p, w2p, b2p)


net_forward = jax.jit(_net_forward_impl)


def init_params(key):
    """Deterministic init mimicking torch.nn.Linear default (U(+-1/sqrt(fan_in)))."""
    k1, k2, k3, k4 = jax.random.split(key, 4)

    def uni(k, shape, fan_in):
        bound = 1.0 / jnp.sqrt(float(fan_in))
        return jax.random.uniform(k, shape, jnp.float32, -bound, bound)

    w1 = uni(k1, (D_IN, D_OUT), D_IN)    # fc1 weight, stored as (in, out)
    b1 = uni(k2, (D_OUT,), D_IN)
    w2 = uni(k3, (D_OUT, D_OUT), D_OUT)  # fc2 weight, stored as (in, out)
    b2 = uni(k4, (D_OUT,), D_OUT)
    # fc3 exists in the PyTorch __init__ but is unused in forward(); omitted.
    return (w1, b1, w2, b2)


def reference_forward(x, params):
    w1, b1, w2, b2 = params
    h = jnp.maximum(x @ w1 + b1, 0.0)
    h = jnp.maximum(h @ w2 + b2, 0.0)
    return h @ w2 + b2


if __name__ == "__main__":
    key = jax.random.PRNGKey(0)
    kp, kx1, kx2 = jax.random.split(key, 3)
    params = init_params(kp)
    padded = prepare_params(params)  # one-time prep, outside the hot path

    # Small case (single grid step).
    x_small = jax.random.normal(kx1, (8, D_IN), jnp.float32)
    y_small = jax.block_until_ready(net_forward(x_small, padded))
    assert y_small.shape == (8, D_OUT)
    assert jnp.allclose(y_small, reference_forward(x_small, params),
                        atol=1e-5, rtol=1e-5)

    # Larger case exercising the batch grid (2 steps, VMEM-resident weights).
    x_big = jax.random.normal(kx2, (1024, D_IN), jnp.float32)
    y_big = jax.block_until_ready(net_forward(x_big, padded))
    assert y_big.shape == (1024, D_OUT)
    assert jnp.allclose(y_big, reference_forward(x_big, params),
                        atol=1e-4, rtol=1e-4)

    print("KERNEL_OK")
</pallas_src>

<mosaic_0001>
module attributes {stable_mosaic.version = 11 : i64} {
  func.func @mlp_kernel(%arg0: i32, %arg1: memref<8x2xf32, #tpu.memory_space<vmem>>, %arg2: memref<8x128xf32, #tpu.memory_space<vmem>>, %arg3: memref<1x128xf32, #tpu.memory_space<vmem>>, %arg4: memref<128x128xf32, #tpu.memory_space<vmem>>, %arg5: memref<1x128xf32, #tpu.memory_space<vmem>>, %arg6: memref<8x3xf32, #tpu.memory_space<vmem>>) attributes {dimension_semantics = [#tpu.dimension_semantics<parallel>], iteration_bounds = array<i64: 1>, scalar_prefetch = 0 : i64, scratch_operands = 0 : i64, tpu.core_type = #tpu.core_type<tc>, window_params = [{transform_indices = @transform_0, window_bounds = array<i64: 8, 2>}, {pipeline_mode = #tpu.pipeline_mode<synchronous>, transform_indices = @transform_1, window_bounds = array<i64: 8, 128>}, {pipeline_mode = #tpu.pipeline_mode<synchronous>, transform_indices = @transform_2, window_bounds = array<i64: 1, 128>}, {pipeline_mode = #tpu.pipeline_mode<synchronous>, transform_indices = @transform_3, window_bounds = array<i64: 128, 128>}, {pipeline_mode = #tpu.pipeline_mode<synchronous>, transform_indices = @transform_4, window_bounds = array<i64: 1, 128>}, {transform_indices = @transform_5, window_bounds = array<i64: 8, 3>}]} {
    %c0 = arith.constant 0 : index
    %c0_0 = arith.constant 0 : index
    %0 = vector.load %arg1[%c0, %c0_0] : memref<8x2xf32, #tpu.memory_space<vmem>>, vector<8x2xf32>
    %c0_1 = arith.constant 0 : index
    %c0_2 = arith.constant 0 : index
    %1 = vector.load %arg2[%c0_1, %c0_2] : memref<8x128xf32, #tpu.memory_space<vmem>>, vector<8x128xf32>
    %2 = vector.extract_strided_slice %0 {offsets = [0, 0], sizes = [8, 1], strides = [1, 1]} : vector<8x2xf32> to vector<8x1xf32>
    %3 = vector.extract_strided_slice %1 {offsets = [0, 0], sizes = [1, 128], strides = [1, 1]} : vector<8x128xf32> to vector<1x128xf32>
    %4 = vector.broadcast %2 : vector<8x1xf32> to vector<8x128xf32>
    %5 = vector.broadcast %3 : vector<1x128xf32> to vector<8x128xf32>
    %6 = arith.mulf %4, %5 : vector<8x128xf32>
    %7 = vector.extract_strided_slice %0 {offsets = [0, 1], sizes = [8, 1], strides = [1, 1]} : vector<8x2xf32> to vector<8x1xf32>
    %8 = vector.extract_strided_slice %1 {offsets = [1, 0], sizes = [1, 128], strides = [1, 1]} : vector<8x128xf32> to vector<1x128xf32>
    %9 = vector.broadcast %7 : vector<8x1xf32> to vector<8x128xf32>
    %10 = vector.broadcast %8 : vector<1x128xf32> to vector<8x128xf32>
    %11 = arith.mulf %9, %10 : vector<8x128xf32>
    %12 = arith.addf %6, %11 : vector<8x128xf32>
    %c0_3 = arith.constant 0 : index
    %c0_4 = arith.constant 0 : index
    %13 = vector.load %arg3[%c0_3, %c0_4] : memref<1x128xf32, #tpu.memory_space<vmem>>, vector<1x128xf32>
    %14 = vector.broadcast %13 : vector<1x128xf32> to vector<8x128xf32>
    %15 = arith.addf %12, %14 : vector<8x128xf32>
    %cst = arith.constant 0.000000e+00 : f32
    %16 = vector.broadcast %cst : f32 to vector<8x128xf32>
    %17 = arith.maximumf %15, %16 : vector<8x128xf32>
    %c0_5 = arith.constant 0 : index
    %c0_6 = arith.constant 0 : index
    %18 = vector.load %arg4[%c0_5, %c0_6] : memref<128x128xf32, #tpu.memory_space<vmem>>, vector<128x128xf32>
    %c0_7 = arith.constant 0 : index
    %c0_8 = arith.constant 0 : index
    %19 = vector.load %arg5[%c0_7, %c0_8] : memref<1x128xf32, #tpu.memory_space<vmem>>, vector<1x128xf32>
    %cst_9 = arith.constant dense<0.000000e+00> : vector<8x128xf32>
    %20 = tpu.matmul %17, %18, %cst_9 {dimension_numbers = #tpu.dot_dimension_numbers<[1], [0], [0], [1], [0, 0, 1, 1], [], []>} : vector<8x128xf32>, vector<128x128xf32>, vector<8x128xf32> -> vector<8x128xf32>
    %21 = vector.broadcast %19 : vector<1x128xf32> to vector<8x128xf32>
    %22 = arith.addf %20, %21 : vector<8x128xf32>
    %cst_10 = arith.constant 0.000000e+00 : f32
    %23 = vector.broadcast %cst_10 : f32 to vector<8x128xf32>
    %24 = arith.maximumf %22, %23 : vector<8x128xf32>
    %cst_11 = arith.constant dense<0.000000e+00> : vector<8x128xf32>
    %25 = tpu.matmul %24, %18, %cst_11 {dimension_numbers = #tpu.dot_dimension_numbers<[1], [0], [0], [1], [0, 0, 1, 1], [], []>} : vector<8x128xf32>, vector<128x128xf32>, vector<8x128xf32> -> vector<8x128xf32>
    %26 = vector.broadcast %19 : vector<1x128xf32> to vector<8x128xf32>
    %27 = arith.addf %25, %26 : vector<8x128xf32>
    %28 = vector.extract_strided_slice %27 {offsets = [0, 0], sizes = [8, 3], strides = [1, 1]} : vector<8x128xf32> to vector<8x3xf32>
    %c0_12 = arith.constant 0 : index
    %c0_13 = arith.constant 0 : index
    %29 = vector.load %arg6[%c0_12, %c0_13] : memref<8x3xf32, #tpu.memory_space<vmem>>, vector<8x3xf32>
    tpu.vector_store %arg6[%c0_12, %c0_13], %28 {strides = array<i32>} : memref<8x3xf32, #tpu.memory_space<vmem>>, vector<8x3xf32>,
    return
  }
  func.func @transform_0(%arg0: i32) -> (i32, i32) {
    %c0_i32 = arith.constant 0 : i32
    %c0_i32_0 = arith.constant 0 : i32
    return %arg0, %c0_i32 : i32, i32
  }
  func.func @transform_1(%arg0: i32) -> (i32, i32) {
    %c0_i32 = arith.constant 0 : i32
    %c0_i32_0 = arith.constant 0 : i32
    %c0_i32_1 = arith.constant 0 : i32
    return %c0_i32, %c0_i32_0 : i32, i32
  }
  func.func @transform_2(%arg0: i32) -> (i32, i32) {
    %c0_i32 = arith.constant 0 : i32
    %c0_i32_0 = arith.constant 0 : i32
    %c0_i32_1 = arith.constant 0 : i32
    return %c0_i32, %c0_i32_0 : i32, i32
  }
  func.func @transform_3(%arg0: i32) -> (i32, i32) {
    %c0_i32 = arith.constant 0 : i32
    %c0_i32_0 = arith.constant 0 : i32
    %c0_i32_1 = arith.constant 0 : i32
    return %c0_i32, %c0_i32_0 : i32, i32
  }
  func.func @transform_4(%arg0: i32) -> (i32, i32) {
    %c0_i32 = arith.constant 0 : i32
    %c0_i32_0 = arith.constant 0 : i32
    %c0_i32_1 = arith.constant 0 : i32
    return %c0_i32, %c0_i32_0 : i32, i32
  }
  func.func @transform_5(%arg0: i32) -> (i32, i32) {
    %c0_i32 = arith.constant 0 : i32
    %c0_i32_0 = arith.constant 0 : i32
    return %arg0, %c0_i32 : i32, i32
  }
}

</mosaic_0001>

<llo_original>
// kernel: _net_forward_impl.1
$region0: #{_net_forward_impl.1}
  #allocation0 [shape = 'u32[]', space=smem, size = 0x4, offset = 0x4, fixed_abs, tag = 'smem constant byte address 0x4 - core index']
  #allocation1 [shape = 'u32[144,128]{1,0:T(1,128)}', space=vmem, size = 0x12000, scoped, tag = 'internal scratch']
  %s0 = inlined_call_operand.vmem [shape: f32[8,2], index: 0, kind: input, shape index: {}]
  %s1 = inlined_call_operand.vmem [shape: f32[8,128], index: 1, kind: input, shape index: {}]
  %s2 = inlined_call_operand.vmem [shape: f32[1,128], index: 2, kind: input, shape index: {}]
  %s3 = inlined_call_operand.hbm [shape: f32[128,128], index: 3, kind: input, shape index: {}]
  %s4 = inlined_call_operand.vmem [shape: f32[1,128], index: 4, kind: input, shape index: {}]
  %s5 = inlined_call_operand.vmem [shape: f32[8,3], index: 5, kind: output, shape index: {}]
  %s6 = sld [smem:[#allocation0]]
  $region34: #{_net_forward_impl.1} parent=0
    _
  %s8 = ssub.s32 1, %s6
  %s9 = scalar_select 0, %s8, %s6
  $region1: #{_net_forward_impl.1} parent=0
    #allocation2 [shape = 'u8[65536]{0}', space=vmem, size = 0x10000, scoped, tag = 'input window, operand 3, single buffered']
    #allocation3 [shape = 's32[1]{0}', space=sflag, size = 0x4, scoped, tag = 'scoped memory for _net_forward_impl.1']
    %10 = vsyncpa [#allocation3], 0
    // Predicated region
    $region2: #{_net_forward_impl.1} parent=1 // pred_check
      _
    $region3: #{_net_forward_impl.1} parent=1 // pred_check_branch
      %12 = sbr.rel (0) target = $region5
    $region4: #{_net_forward_impl.1} parent=1 // pred_region
      _
    $region5: #{_net_forward_impl.1} parent=1 // pred_fallthru
      _
    // Predicated region
    $region6: #{_net_forward_impl.1} parent=1 // pred_check
      _
    $region7: #{_net_forward_impl.1} parent=1 // pred_check_branch
      %14 = sbr.rel (0) target = $region9
    $region8: #{_net_forward_impl.1} parent=1 // pred_region
      _
    $region9: #{_net_forward_impl.1} parent=1 // pred_fallthru
      _
    // Predicated region
    $region10: #{_net_forward_impl.1} parent=1 // pred_check
      _
    $region11: #{_net_forward_impl.1} parent=1 // pred_check_branch
      %16 = sbr.rel (0) target = $region13
    $region12: #{_net_forward_impl.1} parent=1 // pred_region
      _
    $region13: #{_net_forward_impl.1} parent=1 // pred_fallthru
      _
    // Predicated region
    $region14: #{_net_forward_impl.1} parent=1 // pred_check
      _
    $region15: #{_net_forward_impl.1} parent=1 // pred_check_branch
      %18 = sbr.rel (0) target = $region17
    $region16: #{_net_forward_impl.1} parent=1 // pred_region
      %s20 = ssub.s32 2048, 2048
      %21 = vsyncadd [#allocation3], %s20
      %s22 = sshll.u32 [#allocation2], 4
      %s23 = int_to_ptr.vmem [resolvable:$true] %s22
      %28 = dma.hbm_to_vmem [thread:$0]  %s3, 2048, %s23, [#allocation3], 128, 128, 8
    $region17: #{_net_forward_impl.1} parent=1 // pred_fallthru
      _
    // Predicated region
    $region18: #{_net_forward_impl.1} parent=1 // pred_check
      _
    $region19: #{_net_forward_impl.1} parent=1 // pred_check_branch
      %30 = sbr.rel (0) target = $region21
    $region20: #{_net_forward_impl.1} parent=1 // pred_region
      _
    $region21: #{_net_forward_impl.1} parent=1 // pred_fallthru
      _
    // Predicated region
    $region22: #{_net_forward_impl.1} parent=1 // pred_check
      _
    $region23: #{_net_forward_impl.1} parent=1 // pred_check_branch
      %32 = sbr.rel (0) target = $region25
    $region24: #{_net_forward_impl.1} parent=1 // pred_region
      %33 = dma.done [#allocation3], 2048
    $region25: #{_net_forward_impl.1} parent=1 // pred_fallthru
      _
    %v34 = vld [vmem:[%s0] sm:$0xff]
    %v35 = vld [vmem:[%s1] sm:$0xff]
    %37 = vset.pattern.permute.xlu0 0
    %38 = vperm.xlu0 %37, %v34
    %v39 = vpop.permute.xlu0 %38
    %v41 = vlaneseq
    %v42 = vshrl.u32 %v41, 7
    %v43 = vsub.s32 0, %v42
    %v44 = vrot.slane %v35, %v43
    %v45 = vmul.f32 %v39, %v44
    %46 = vset.pattern.permute.xlu0 1
    %47 = vperm.xlu0 %46, %v34
    %v48 = vpop.permute.xlu0 %47
    %v50 = vlaneseq
    %v51 = vshrl.u32 %v50, 7
    %v52 = vsub.s32 1, %v51
    %v53 = vrot.slane %v35, %v52
    %v54 = vmul.f32 %v48, %v53
    %v55 = vadd.f32 %v45, %v54
    %v56 = vld [vmem:[%s2] sm:$0x1]
    %v58 = vlaneseq
    %v59 = vshrl.u32 %v58, 7
    %v60 = vsub.s32 0, %v59
    %v61 = vrot.slane %v56, %v60
    %v63 = vadd.f32 %v55, %v61
    %v64 = vmax.f32 %v63, 0.0
    %v65 = vld [vmem:[#allocation2] sm:$0xff]
    %v66 = vld [vmem:[#allocation2 + $0x8] sm:$0xff]
    %v67 = vld [vmem:[#allocation2 + $0x10] sm:$0xff]
    %v68 = vld [vmem:[#allocation2 + $0x18] sm:$0xff]
    %v69 = vld [vmem:[#allocation2 + $0x20] sm:$0xff]
    %v70 = vld [vmem:[#allocation2 + $0x28] sm:$0xff]
    %v71 = vld [vmem:[#allocation2 + $0x30] sm:$0xff]
    %v72 = vld [vmem:[#allocation2 + $0x38] sm:$0xff]
    %v73 = vld [vmem:[#allocation2 + $0x40] sm:$0xff]
    %v74 = vld [vmem:[#allocation2 + $0x48] sm:$0xff]
    %v75 = vld [vmem:[#allocation2 + $0x50] sm:$0xff]
    %v76 = vld [vmem:[#allocation2 + $0x58] sm:$0xff]
    %v77 = vld [vmem:[#allocation2 + $0x60] sm:$0xff]
    %v78 = vld [vmem:[#allocation2 + $0x68] sm:$0xff]
    %v79 = vld [vmem:[#allocation2 + $0x70] sm:$0xff]
    %v80 = vld [vmem:[#allocation2 + $0x78] sm:$0xff]
    %v81 = vld [vmem:[%s4] sm:$0x1]
    %v83 = vlaneseq
    %v84 = vshrl.u32 %v83, 7
    %v85 = vsub.s32 0, %v84
    %v86 = vrot.slane %v81, %v85
    %88 = vmatprep.subr.mxu0 0.0
    %89 = vmatpush1.msra.mxu0 %v80
    %90 = vmatprep.subr.mxu0 0.0
    %91 = vmatpush1.msra.mxu0 %v79
    %92 = vmatprep.subr.mxu0 0.0
    %93 = vmatpush1.msra.mxu0 %v78
    %94 = vmatprep.subr.mxu0 0.0
    %95 = vmatpush1.msra.mxu0 %v77
    %96 = vmatprep.subr.mxu0 0.0
    %97 = vmatpush1.msra.mxu0 %v76
    %98 = vmatprep.subr.mxu0 0.0
    %99 = vmatpush1.msra.mxu0 %v75
    %100 = vmatprep.subr.mxu0 0.0
    %101 = vmatpush1.msra.mxu0 %v74
    %102 = vmatprep.subr.mxu0 0.0
    %103 = vmatpush1.msra.mxu0 %v73
    %104 = vmatprep.subr.mxu0 0.0
    %105 = vmatpush1.msra.mxu0 %v72
    %106 = vmatprep.subr.mxu0 0.0
    %107 = vmatpush1.msra.mxu0 %v71
    %108 = vmatprep.subr.mxu0 0.0
    %109 = vmatpush1.msra.mxu0 %v70
    %110 = vmatprep.subr.mxu0 0.0
    %111 = vmatpush1.msra.mxu0 %v69
    %112 = vmatprep.subr.mxu0 0.0
    %113 = vmatpush1.msra.mxu0 %v68
    %114 = vmatprep.subr.mxu0 0.0
    %115 = vmatpush1.msra.mxu0 %v67
    %116 = vmatprep.subr.mxu0 0.0
    %117 = vmatpush1.msra.mxu0 %v66
    %118 = vmatprep.subr.mxu0 0.0
    %119 = vmatpush1.msra.mxu0 %v65
    %120 = vmatprep.subr.mxu0 0.0
    %121 = vmatpush2.msra.mxu0 0.0
    %122 = vmatprep.subr.mxu0 0.0
    %123 = vmatpush2.msra.mxu0 0.0
    %124 = vmatprep.subr.mxu0 0.0
    %125 = vmatpush2.msra.mxu0 0.0
    %126 = vmatprep.subr.mxu0 0.0
    %127 = vmatpush2.msra.mxu0 0.0
    %128 = vmatprep.subr.mxu0 0.0
    %129 = vmatpush2.msra.mxu0 0.0
    %130 = vmatprep.subr.mxu0 0.0
    %131 = vmatpush2.msra.mxu0 0.0
    %132 = vmatprep.subr.mxu0 0.0
    %133 = vmatpush2.msra.mxu0 0.0
    %134 = vmatprep.subr.mxu0 0.0
    %135 = vmatpush2.msra.mxu0 0.0
    %136 = vmatprep.subr.mxu0 0.0
    %137 = vmatpush2.msra.mxu0 0.0
    %138 = vmatprep.subr.mxu0 0.0
    %139 = vmatpush2.msra.mxu0 0.0
    %140 = vmatprep.subr.mxu0 0.0
    %141 = vmatpush2.msra.mxu0 0.0
    %142 = vmatprep.subr.mxu0 0.0
    %143 = vmatpush2.msra.mxu0 0.0
    %144 = vmatprep.subr.mxu0 0.0
    %145 = vmatpush2.msra.mxu0 0.0
    %146 = vmatprep.subr.mxu0 0.0
    %147 = vmatpush2.msra.mxu0 0.0
    %148 = vmatprep.subr.mxu0 0.0
    %149 = vmatpush2.msra.mxu0 0.0
    %150 = vmatprep.subr.mxu0 0.0
    %151 = vmatpush2.msra.mxu0 0.0
    %152 = vmatprep.mubr.f32.mxu0 0.0
    %153 = vmatmul.mubr.f32.gmra.mxu0 %v64
    %v154 = vpop.f32.mrf.mxu0
    %v155 = vadd.f32 %v86, %v154
    %v156 = vpop.f32.mrf.mxu0
    %157 = vdwg.mxu0
    %v158 = vmax.f32 %v155, 0.0
    %159 = vmatprep.subr.mxu0 0.0
    %160 = vmatpush1.msra.mxu0 %v80
    %161 = vmatprep.subr.mxu0 0.0
    %162 = vmatpush1.msra.mxu0 %v79
    %163 = vmatprep.subr.mxu0 0.0
    %164 = vmatpush1.msra.mxu0 %v78
    %165 = vmatprep.subr.mxu0 0.0
    %166 = vmatpush1.msra.mxu0 %v77
    %167 = vmatprep.subr.mxu0 0.0
    %168 = vmatpush1.msra.mxu0 %v76
    %169 = vmatprep.subr.mxu0 0.0
    %170 = vmatpush1.msra.mxu0 %v75
    %171 = vmatprep.subr.mxu0 0.0
    %172 = vmatpush1.msra.mxu0 %v74
    %173 = vmatprep.subr.mxu0 0.0
    %174 = vmatpush1.msra.mxu0 %v73
    %175 = vmatprep.subr.mxu0 0.0
    %176 = vmatpush1.msra.mxu0 %v72
    %177 = vmatprep.subr.mxu0 0.0
    %178 = vmatpush1.msra.mxu0 %v71
    %179 = vmatprep.subr.mxu0 0.0
    %180 = vmatpush1.msra.mxu0 %v70
    %181 = vmatprep.subr.mxu0 0.0
    %182 = vmatpush1.msra.mxu0 %v69
    %183 = vmatprep.subr.mxu0 0.0
    %184 = vmatpush1.msra.mxu0 %v68
    %185 = vmatprep.subr.mxu0 0.0
    %186 = vmatpush1.msra.mxu0 %v67
    %187 = vmatprep.subr.mxu0 0.0
    %188 = vmatpush1.msra.mxu0 %v66
    %189 = vmatprep.subr.mxu0 0.0
    %190 = vmatpush1.msra.mxu0 %v65
    %191 = vmatprep.subr.mxu0 0.0
    %192 = vmatpush2.msra.mxu0 0.0
    %193 = vmatprep.subr.mxu0 0.0
    %194 = vmatpush2.msra.mxu0 0.0
    %195 = vmatprep.subr.mxu0 0.0
    %196 = vmatpush2.msra.mxu0 0.0
    %197 = vmatprep.subr.mxu0 0.0
    %198 = vmatpush2.msra.mxu0 0.0
    %199 = vmatprep.subr.mxu0 0.0
    %200 = vmatpush2.msra.mxu0 0.0
    %201 = vmatprep.subr.mxu0 0.0
    %202 = vmatpush2.msra.mxu0 0.0
    %203 = vmatprep.subr.mxu0 0.0
    %204 = vmatpush2.msra.mxu0 0.0
    %205 = vmatprep.subr.mxu0 0.0
    %206 = vmatpush2.msra.mxu0 0.0
    %207 = vmatprep.subr.mxu0 0.0
    %208 = vmatpush2.msra.mxu0 0.0
    %209 = vmatprep.subr.mxu0 0.0
    %210 = vmatpush2.msra.mxu0 0.0
    %211 = vmatprep.subr.mxu0 0.0
    %212 = vmatpush2.msra.mxu0 0.0
    %213 = vmatprep.subr.mxu0 0.0
    %214 = vmatpush2.msra.mxu0 0.0
    %215 = vmatprep.subr.mxu0 0.0
    %216 = vmatpush2.msra.mxu0 0.0
    %217 = vmatprep.subr.mxu0 0.0
    %218 = vmatpush2.msra.mxu0 0.0
    %219 = vmatprep.subr.mxu0 0.0
    %220 = vmatpush2.msra.mxu0 0.0
    %221 = vmatprep.subr.mxu0 0.0
    %222 = vmatpush2.msra.mxu0 0.0
    %223 = vmatprep.mubr.f32.mxu0 0.0
    %224 = vmatmul.mubr.f32.gmra.mxu0 %v158
    %v225 = vpop.f32.mrf.mxu0
    %v226 = vadd.f32 %v86, %v225
    %v227 = vpop.f32.mrf.mxu0
    %228 = vdwg.mxu0
    %vm229 = vcmask 23552
    %230 = vst.msk [vmem:[%s5] sm:$0xff] %vm229, %v226
    // Predicated region
    $region26: #{_net_forward_impl.1} parent=1 // pred_check
      _
    $region27: #{_net_forward_impl.1} parent=1 // pred_check_branch
      %232 = sbr.rel (0) target = $region29
    $region28: #{_net_forward_impl.1} parent=1 // pred_region
      _
    $region29: #{_net_forward_impl.1} parent=1 // pred_fallthru
      _
    // Predicated region
    $region30: #{_net_forward_impl.1} parent=1 // pred_check
      _
    $region31: #{_net_forward_impl.1} parent=1 // pred_check_branch
      %234 = sbr.rel (0) target = $region33
    $region32: #{_net_forward_impl.1} parent=1 // pred_region
      _
    $region33: #{_net_forward_impl.1} parent=1 // pred_fallthru
      _
    %235 = vsyncpa [#allocation3], 1

</llo_original>
